<compile_context>
chip_gen: v6e
topology: v6e:2x2x1
jax: 0.10.0
libtpu: 0.0.40
codegen_flags: <defaults>
</compile_context>

<pallas_src>
import jax
import jax.numpy as jnp
from jax import lax
from jax.experimental import pallas as pl
from jax.experimental.pallas import tpu as pltpu  # noqa: F401  (kept for parity)


# ----------------------------- synthetic "hyp" config -----------------------------
class hyp:
    do_feat3d = True
    do_occ = True
    do_emb3d = True
    do_view = False                    # ViewNet / perspective unprojection disabled
    do_midas_depth_estimation = False  # no torch.hub on TPU
    fit_vox = True
    Z = Y = X = 16
    feat3d_dim = 8
    feat3d_in_dim = 4


Z4 = hyp.Z // 4
Y4 = hyp.Y // 4
X4 = hyp.X // 4


# =============================== Pallas kernels ===================================
def _apply4x4_kernel(tb_ref, x_ref, o_ref):
    # tb: (Kt*BS*4, BS*4) block-diagonal transform stack, x: (BS*4, N) packed points.
    # One f32 MXU matmul applies all Kt*BS rigid transforms in one shot.
    o_ref[...] = jnp.dot(tb_ref[...], x_ref[...],
                         preferred_element_type=jnp.float32)


def apply_4x4_stacked(T_stack, xyz):
    """Apply Kt rigid transforms to one packed point cloud in a single grid-less
    pallas_call.  T_stack: (Kt, BS, 4, 4); xyz: (BS, N, 3) -> (Kt, BS, N, 3)."""
    Kt, BS = T_stack.shape[:2]
    N = xyz.shape[1]
    xyz1 = jnp.concatenate([xyz, jnp.ones((BS, N, 1), jnp.float32)], axis=-1)
    x_flat = jnp.transpose(xyz1, (0, 2, 1)).reshape(BS * 4, N).astype(jnp.float32)
    # Block-diagonal layout: row (k, b, i) holds T[k, b, i, :] at columns b*4:(b+1)*4.
    eye = jnp.eye(BS, dtype=jnp.float32)
    t_block = (T_stack.astype(jnp.float32)[:, :, :, None, :] *
               eye[None, :, None, :, None]).reshape(Kt * BS * 4, BS * 4)
    out = pl.pallas_call(
        _apply4x4_kernel,
        out_shape=jax.ShapeDtypeStruct((Kt * BS * 4, N), jnp.float32),
    )(t_block, x_flat)
    out = out.reshape(Kt, BS, 4, N)
    return jnp.transpose(out[:, :, :3, :], (0, 1, 3, 2))               # (Kt, BS, N, 3)


def fused_feat_occ_emb(lhsT_bf16, wT_bf16, b_col, w_occ_col, b_occ,
                       occ_sup, free_sum, valid, emb_valid, BV):
    """Single pallas_call: transposed Feat3dNet matmul (fast f0, fast f1, slow)
    plus OccNet head, sigmoid prediction, balanced BCE occ loss and masked-L2
    emb3d loss computed in the epilogue on the VMEM-resident f32 result.

    lhsT_bf16: (K, M=3*BV) bf16 im2col columns; wT_bf16: (C, K) bf16;
    b_col: (C, 1) f32; w_occ_col: (C, 1) f32; b_occ: (1, 1) f32;
    occ_sup/free_sum/valid/emb_valid: (BV,) f32.
    Returns yT (C, M) f32, pred (1, BV), occ_loss, emb_loss."""
    C, _ = wT_bf16.shape
    M = lhsT_bf16.shape[1]
    row = lambda v: v.reshape(1, BV).astype(jnp.float32)

    def kernel(xT_ref, wT_ref, b_ref, wocc_ref, bocc_ref,
               occ_ref, freesum_ref, valid_ref, embvalid_ref,
               yT_ref, pred_ref, occ_loss_ref, emb_loss_ref):
        # ---- MXU: (C, K) bf16 @ (K, M) bf16 -> (C, M) f32, voxels on lanes ----
        yT = jnp.dot(wT_ref[...], xT_ref[...],
                     preferred_element_type=jnp.float32) + b_ref[...]
        yT_ref[...] = yT

        featT = yT[:, 0:BV]               # fast net, frame 0      (C, BV)
        altT = yT[:, 2 * BV:3 * BV]       # slow net (same weights) (C, BV)

        # ---- OccNet 1x1x1 head in f32 (exact), logits lane-dense (1, BV) ----
        logits = jnp.sum(featT * wocc_ref[...], axis=0, keepdims=True) + bocc_ref[...]
        pred_ref[...] = 1.0 / (1.0 + jnp.exp(-logits))                 # exact sigmoid

        # ---- occ: balanced masked BCE-with-logits (all f32) ----
        occ = occ_ref[...]
        val = valid_ref[...]
        # free-space dilation finish: 1 - clamp(neighborhood_sum(1 - free), 0, 1)
        free = 1.0 - jnp.clip(freesum_ref[...], 0.0, 1.0)
        soft_abs = jnp.log(1.0 + jnp.exp(-jnp.abs(logits)))            # stable softplus core
        sp_pos = jnp.maximum(-logits, 0.0) + soft_abs                  # softplus(-logits): label 1
        sp_neg = jnp.maximum(logits, 0.0) + soft_abs                   # softplus(+logits): label 0
        pos_num = jnp.sum(occ * val * sp_pos, axis=(0, 1), keepdims=True)
        pos_den = jnp.maximum(jnp.sum(occ * val, axis=(0, 1), keepdims=True), 1.0)
        neg_num = jnp.sum(free * val * sp_neg, axis=(0, 1), keepdims=True)
        neg_den = jnp.maximum(jnp.sum(free * val, axis=(0, 1), keepdims=True), 1.0)
        occ_loss_ref[...] = pos_num / pos_den + neg_num / neg_den      # exact division

        # ---- emb3d: masked L2 between L2-normalized feature volumes ----
        an = featT * lax.rsqrt(jnp.sum(featT * featT, axis=0, keepdims=True) + 1e-6)
        bn = altT * lax.rsqrt(jnp.sum(altT * altT, axis=0, keepdims=True) + 1e-6)
        ev = embvalid_ref[...]
        d = jnp.sum((an - bn) ** 2, axis=0, keepdims=True)             # (1, BV)
        num = jnp.sum(d * ev, axis=(0, 1), keepdims=True)
        den = jnp.maximum(jnp.sum(ev, axis=(0, 1), keepdims=True), 1.0)
        emb_loss_ref[...] = num / den

    yT, pred, occ_loss, emb_loss = pl.pallas_call(
        kernel,
        out_shape=(jax.ShapeDtypeStruct((C, M), jnp.float32),
                   jax.ShapeDtypeStruct((1, BV), jnp.float32),
                   jax.ShapeDtypeStruct((1, 1), jnp.float32),
                   jax.ShapeDtypeStruct((1, 1), jnp.float32)),
    )(lhsT_bf16, wT_bf16, b_col, w_occ_col, b_occ,
      row(occ_sup), row(free_sum), row(valid), row(emb_valid))
    return yT, pred, occ_loss[0, 0], emb_loss[0, 0]


# =============================== JAX glue helpers ==================================
def pack_seqdim(x, B):
    return x.reshape((B * x.shape[1],) + x.shape[2:])


def unpack_seqdim(x, B):
    return x.reshape((B, x.shape[0] // B) + x.shape[1:])


def safe_inverse(T):
    # rigid 4x4 inverse:  [R t; 0 1]^-1 = [R^T  -R^T t; 0 1]
    R = T[..., :3, :3]
    t = T[..., :3, 3:4]
    Rt = jnp.swapaxes(R, -1, -2)
    tinv = -jnp.matmul(Rt, t)
    top = jnp.concatenate([Rt, tinv], axis=-1)
    bot = jnp.broadcast_to(jnp.array([0.0, 0.0, 0.0, 1.0], T.dtype),
                           top.shape[:-2] + (1, 4))
    return jnp.concatenate([top, bot], axis=-2)


def compute_bounds(xyz_frame1):
    # fit_vox branch: per-batch symmetric bounds from frame-1 point cloud.
    # TODO(synk): original utils_vox uses per-axis / scene-box bounds and random
    # centroid jitter; here bounds are symmetric from a global max and jitter = 0.
    xyz_max = jnp.minimum(jnp.max(xyz_frame1), 20.0) / 2.0
    centroid = jnp.stack([jnp.zeros(()), jnp.zeros(()), xyz_max])
    return centroid - xyz_max, centroid + xyz_max


def voxelize_xyz(xyz, mins, maxs, Zr, Yr, Xr):
    # xyz: (N, 3) with columns (x, y, z) in the vox reference frame.
    # TODO(synk): data-dependent scatter stays in plain JAX (no clean Pallas scatter).
    vox = (maxs - mins) / jnp.array([Xr, Yr, Zr], jnp.float32)
    idx = jnp.floor((xyz - mins) / vox).astype(jnp.int32)
    xi, yi, zi = idx[:, 0], idx[:, 1], idx[:, 2]
    inb = ((xi >= 0) & (xi < Xr) & (yi >= 0) & (yi < Yr) & (zi >= 0) & (zi < Zr))
    flat = (jnp.clip(zi, 0, Zr - 1) * (Yr * Xr) +
            jnp.clip(yi, 0, Yr - 1) * Xr + jnp.clip(xi, 0, Xr - 1))
    occ = jnp.zeros((Zr * Yr * Xr,), jnp.float32).at[flat].max(inb.astype(jnp.float32))
    return occ.reshape(Zr, Yr, Xr)


def voxel_centers(mins, maxs, Zr, Yr, Xr):
    vx = (maxs[0] - mins[0]) / Xr
    vy = (maxs[1] - mins[1]) / Yr
    vz = (maxs[2] - mins[2]) / Zr
    zs = mins[2] + (jnp.arange(Zr, dtype=jnp.float32) + 0.5) * vz
    ys = mins[1] + (jnp.arange(Yr, dtype=jnp.float32) + 0.5) * vy
    xs = mins[0] + (jnp.arange(Xr, dtype=jnp.float32) + 0.5) * vx
    zg, yg, xg = jnp.meshgrid(zs, ys, xs, indexing="ij")
    return jnp.stack([xg, yg, zg], axis=-1).reshape(-1, 3)             # (V, 3) as (x, y, z)


def unproject_rgb_to_mem(rgb_chw, mins, maxs, Zr, Yr, Xr, pix_T_cam, H, W):
    # TODO(synk): bilinear grid_sample replaced by nearest-neighbour gather (glue).
    cen = voxel_centers(mins, maxs, Zr, Yr, Xr)
    cen1 = jnp.concatenate([cen, jnp.ones((cen.shape[0], 1), jnp.float32)], axis=-1)
    p = cen1 @ pix_T_cam.T
    z = p[:, 2]
    eps = 1e-4
    zsafe = jnp.where(jnp.abs(z) < eps, eps, z)
    u = p[:, 0] / zsafe
    v = p[:, 1] / zsafe
    valid = (z > eps) & (u >= 0) & (u <= W - 1) & (v >= 0) & (v <= H - 1)
    ui = jnp.clip(jnp.round(u).astype(jnp.int32), 0, W - 1)
    vi = jnp.clip(jnp.round(v).astype(jnp.int32), 0, H - 1)
    rgb_hwc = jnp.transpose(rgb_chw, (1, 2, 0))
    samp = rgb_hwc[vi, ui] * valid[:, None].astype(jnp.float32)
    return samp.reshape(Zr, Yr, Xr, 3)


def _im2col_stride4_T(vol):
    """vol: (Nitems, Z, Y, X, C) -> (64*C, Nitems*Z4*Y4*X4) columns for the
    strided 4x4x4 conv, already transposed so the fused kernel's MXU matmul
    produces channels-on-sublanes / voxels-on-lanes."""
    n, Zf, Yf, Xf, Cin = vol.shape
    x = vol.reshape(n, Zf // 4, 4, Yf // 4, 4, Xf // 4, 4, Cin)
    x = jnp.transpose(x, (2, 4, 6, 7, 0, 1, 3, 5))       # (4z,4y,4x,C, n,Z4,Y4,X4)
    return x.reshape(4 * 4 * 4 * Cin, n * (Zf // 4) * (Yf // 4) * (Xf // 4))


# ================================== the model =======================================
class CarlaMocModelPallas:
    def __init__(self, key):
        self.crop = (18, 18, 18)
        C = hyp.feat3d_dim
        K = 4 * 4 * 4 * hyp.feat3d_in_dim
        k1, k2 = jax.random.split(key)
        w_feat = jax.random.normal(k1, (K, C), jnp.float32) * 0.05
        b_feat = jnp.zeros((C,), jnp.float32)
        w_occ = jax.random.normal(k2, (C, 1), jnp.float32) * 0.1
        b_occ = jnp.zeros((1,), jnp.float32)
        # TODO(synk): Feat3dNet's multi-layer conv3d encoder/decoder is reduced to a
        # single strided 4x4x4 conv (im2col + MXU matmul) with synthetic weights.
        # Stored transposed: the fused kernel computes wT @ xT so voxels land on lanes.
        self.wT_feat_bf16 = jnp.transpose(w_feat).astype(jnp.bfloat16)   # (C, K) bf16
        self.b_feat_col = b_feat.reshape(C, 1)                           # (C, 1) f32
        # feat3dnet_slow.load_state_dict(feat3dnet.state_dict()) -> identical weights,
        # so the slow-net forward shares the same matmul weights.
        # OccNet 1x1x1 head is applied in f32 inside the fused kernel's epilogue.
        self.w_occ_col = w_occ                                           # (C, 1) f32
        self.b_occ = b_occ.reshape(1, 1)                                 # (1, 1) f32
        # TODO(synk): ViewNet and MiDaS (torch.hub) have no Pallas equivalent here.

    def crop_feat(self, feat_pad, crop):
        Zp, Yp, Xp = crop
        return feat_pad[..., Zp:-Zp, Yp:-Yp, Xp:-Xp]

    def pad_feat(self, feat, crop):
        Zp, Yp, Xp = crop
        pads = [(0, 0)] * (feat.ndim - 3) + [(Zp, Zp), (Yp, Yp), (Xp, Xp)]
        return jnp.pad(feat, pads)

    # ---------------------------------------------------------------------------
    def prepare_common_tensors(self, feed):
        self.B = feed["set_batch_size"]
        self.S = feed["set_seqlen"]
        B = self.B
        __p = lambda x: pack_seqdim(x, B)
        __u = lambda x: unpack_seqdim(x, B)

        self.rgb_camXs = feed["rgb_camXs"].astype(jnp.float32)         # (B,S,3,H,W)
        self.pix_T_cams = feed["pix_T_cams"].astype(jnp.float32)       # (B,S,4,4)
        self.origin_T_camRs = feed["origin_T_camRs"].astype(jnp.float32)
        self.origin_T_camXs = feed["origin_T_camXs"].astype(jnp.float32)

        def get_camM_T_camXs(origin_T_camXs, ind=0):
            camM_T_origin = safe_inverse(origin_T_camXs[:, ind:ind + 1])
            return jnp.matmul(camM_T_origin, origin_T_camXs)

        self.camX0s_T_camXs = get_camM_T_camXs(self.origin_T_camXs, 0)
        self.camR0s_T_camRs = get_camM_T_camXs(self.origin_T_camRs, 0)
        self.camRs_T_camR0 = __u(safe_inverse(__p(self.camR0s_T_camRs)))
        self.camRs_T_camXs = __u(jnp.matmul(safe_inverse(__p(self.origin_T_camRs)),
                                            __p(self.origin_T_camXs)))
        self.camXs_T_camRs = __u(safe_inverse(__p(self.camRs_T_camXs)))
        self.camXs_T_camX0s = __u(safe_inverse(__p(self.camX0s_T_camXs)))
        self.camX0_T_camR0 = jnp.matmul(self.camX0s_T_camXs[:, 0],
                                        self.camXs_T_camRs[:, 0])
        self.camR0s_T_camXs = jnp.matmul(self.camR0s_T_camRs, self.camRs_T_camXs)

        self.H = self.rgb_camXs.shape[-2]
        self.W = self.rgb_camXs.shape[-1]
        self.Z, self.Y, self.X = hyp.Z, hyp.Y, hyp.X
        self.Z4, self.Y4, self.X4 = Z4, Y4, X4

        self.xyz_camXs = feed["xyz_camXs"].astype(jnp.float32)         # (B,S,N,3)
        # all three rigid point-cloud transforms in one grid-less Pallas matmul
        # (xyz_camR0s uses camR0s_T_camXs = camR0s_T_camRs @ camRs_T_camXs, which is
        #  mathematically identical to transforming xyz_camRs by camR0s_T_camRs).
        T_stack = jnp.stack([__p(self.camRs_T_camXs),
                             __p(self.camX0s_T_camXs),
                             __p(self.camR0s_T_camXs)], axis=0)        # (3, BS, 4, 4)
        xyz_all = apply_4x4_stacked(T_stack, __p(self.xyz_camXs))      # (3, BS, N, 3)
        self.xyz_camRs = __u(xyz_all[0])
        self.xyz_camX0s = __u(xyz_all[1])
        self.xyz_camR0s = __u(xyz_all[2])

        # fit_vox: per-batch voxel bounds from frame-1 point cloud (noise = 0), vmapped.
        self.vox_mins, self.vox_maxs = jax.vmap(compute_bounds)(self.xyz_camXs[:, 1])

        # TODO(synk): create_depth_image / depth2pointcloud / valid_camXs only feed the
        # (disabled) do_view branch and tensorboard summaries; skipped.
        return True

    # ---------------------------------------------------------------------------
    def run_train(self, feed):
        B, S = self.B, self.S
        Z, Y, X = self.Z, self.Y, self.X
        Z4_, Y4_, X4_ = self.Z4, self.Y4, self.X4
        C = hyp.feat3d_dim
        results = dict()
        assert S == 2
        mins_all, maxs_all = self.vox_mins, self.vox_maxs              # (B,3)

        vox_fn = lambda xyz, mn, mx: voxelize_xyz(xyz, mn, mx, Z, Y, X)
        unp_fn = lambda rgb, mn, mx, pix: unproject_rgb_to_mem(
            rgb, mn, mx, Z, Y, X, pix, self.H, self.W)

        # ------------------------------ feat3d inputs ------------------------------
        occXs = jax.vmap(jax.vmap(vox_fn, in_axes=(0, None, None)),
                         in_axes=(0, 0, 0))(self.xyz_camXs, mins_all, maxs_all)
        unpXs = jax.vmap(jax.vmap(unp_fn, in_axes=(0, None, None, 0)),
                         in_axes=(0, 0, 0, 0))(self.rgb_camXs, mins_all, maxs_all,
                                               self.pix_T_cams)
        occXs = occXs[..., None]                                        # (B,S,Z,Y,X,1)
        featXs_input = jnp.concatenate([occXs, occXs * unpXs], axis=-1)  # (B,S,Z,Y,X,4)

        # ---------------------- emb3d alt input (slow net) ------------------------
        pixX0_T_camX1 = jnp.matmul(self.pix_T_cams[:, 1], self.camX0s_T_camXs[:, 1])
        occ_memX0 = jax.vmap(vox_fn)(self.xyz_camX0s[:, 1], mins_all, maxs_all)[..., None]
        unp_memX0 = jax.vmap(unp_fn)(self.rgb_camXs[:, 1], mins_all, maxs_all,
                                     pixX0_T_camX1)
        feat_memX0_input = jnp.concatenate([occ_memX0, occ_memX0 * unp_memX0], axis=-1)

        # --- im2col columns: [fast frame0 | fast frame1 | slow] along the lane axis ---
        fast_items = jnp.transpose(featXs_input, (1, 0, 2, 3, 4, 5)).reshape(
            S * B, Z, Y, X, hyp.feat3d_in_dim)
        fast_cols = _im2col_stride4_T(fast_items)                       # (256, S*B*V)
        slow_cols = _im2col_stride4_T(feat_memX0_input)                 # (256, B*V)
        lhsT = jnp.concatenate([fast_cols, slow_cols], axis=1)          # (256, 3*B*V)
        BV = B * Z4_ * Y4_ * X4_

        # valid/altvalid are ones_like in the original model on this path.
        valid_flat = jnp.ones((BV,), jnp.float32)
        emb_valid_flat = jnp.round(valid_flat) * jnp.round(valid_flat)

        # ---------------------------- occ supervision ------------------------------
        def occ_sup_fn(xyz_agg, mn, mx):
            occ = voxelize_xyz(xyz_agg, mn, mx, Z4_, Y4_, X4_)
            # TODO(synk): ray-marching free-space supervision approximated with
            # fractional samples along the camera rays (glue-level approximation).
            free_raw = jnp.zeros_like(occ)
            for frac in (0.25, 0.5, 0.75):
                free_raw = jnp.maximum(
                    free_raw, voxelize_xyz(xyz_agg * frac, mn, mx, Z4_, Y4_, X4_))
            return occ, free_raw * (1.0 - occ)

        xyz_agg_all = self.xyz_camX0s.reshape(B, S * self.xyz_camX0s.shape[2], 3)
        occ_sup, free_sup = jax.vmap(occ_sup_fn)(xyz_agg_all, mins_all, maxs_all)
        # 3x3x3 neighborhood sum of (1 - free) in XLA (reduce_window); the
        # clamp + invert finishing step happens inside the fused kernel.
        free_sum = lax.reduce_window(1.0 - free_sup, 0.0, lax.add,
                                     (1, 3, 3, 3), (1, 1, 1, 1),
                                     ((0, 0), (1, 1), (1, 1), (1, 1)))

        # -------- single fused MXU matmul + occ-head + occ/emb3d loss epilogue --------
        # TODO(synk): the slow-net output is not stop-gradient'ed (forward-only script).
        yT, pred, occ_loss, emb3d_loss = fused_feat_occ_emb(
            lhsT.astype(jnp.bfloat16), self.wT_feat_bf16, self.b_feat_col,
            self.w_occ_col, self.b_occ,
            occ_sup.reshape(BV), free_sum.reshape(BV),
            valid_flat, emb_valid_flat, BV)

        feat_halfmemX0 = jnp.transpose(yT[:, 0:BV]).reshape(B, Z4_, Y4_, X4_, C)
        results["feat_halfmemX0"] = feat_halfmemX0
        # feat_halfmemX1 = yT[:, BV:2*BV] only feeds the (disabled) do_view branch.

        # TODO(synk): Feat3dNet's auxiliary smoothness loss treated as 0.
        feat3d_loss = jnp.float32(0.0)
        total_loss = feat3d_loss
        # TODO(synk): apply_4x4_to_vox warps (feat_halfmemR) feed summaries only; skipped.
        if hyp.do_occ:
            total_loss = total_loss + occ_loss
            results["occ_memX0_pred"] = pred.reshape(B, Z4_, Y4_, X4_, 1)
        if hyp.do_emb3d:
            total_loss = total_loss + emb3d_loss

        # TODO(synk): do_view (ViewNet) and tensorboard summaries are not implemented.
        return (total_loss, results, False)

    # ---------------------------------------------------------------------------
    def forward(self, feed):
        set_name = feed["set_name"]
        ok = self.prepare_common_tensors(feed)
        if ok:
            if set_name in ("train", "val"):
                return self.run_train(feed)
            return False
        return (jnp.float32(0.0), None, False)


# ===================================== main ==========================================
if __name__ == "__main__":
    key = jax.random.PRNGKey(0)
    kp, k_rgb, k_xyz, k_rotX, k_tX, k_rotR, k_tR = jax.random.split(key, 7)

    B, S, H, W, N = 2, 2, 16, 16, 128

    rgb_camXs = jax.random.uniform(k_rgb, (B, S, 3, H, W), minval=-0.5, maxval=0.5)

    xy = jax.random.uniform(k_xyz, (B, S, N, 2), minval=-2.0, maxval=2.0)
    zz = jax.random.uniform(jax.random.fold_in(k_xyz, 1), (B, S, N, 1),
                            minval=2.0, maxval=10.0)
    xyz_camXs = jnp.concatenate([xy, zz], axis=-1)

    fx = fy = float(W)
    pix = jnp.array([[fx, 0.0, W / 2.0, 0.0],
                     [0.0, fy, H / 2.0, 0.0],
                     [0.0, 0.0, 1.0, 0.0],
                     [0.0, 0.0, 0.0, 1.0]], jnp.float32)
    pix_T_cams = jnp.broadcast_to(pix, (B, S, 4, 4))

    def make_poses(krot, kt):
        ang = jax.random.uniform(krot, (B, S), minval=-0.1, maxval=0.1)
        t = jax.random.uniform(kt, (B, S, 3), minval=-0.5, maxval=0.5)
        c, s = jnp.cos(ang), jnp.sin(ang)
        zeros = jnp.zeros_like(c)
        ones = jnp.ones_like(c)
        R = jnp.stack([jnp.stack([c, zeros, s], -1),
                       jnp.stack([zeros, ones, zeros], -1),
                       jnp.stack([-s, zeros, c], -1)], -2)              # (B,S,3,3)
        top = jnp.concatenate([R, t[..., None]], axis=-1)
        bot = jnp.broadcast_to(jnp.array([0.0, 0.0, 0.0, 1.0]), (B, S, 1, 4))
        return jnp.concatenate([top, bot], axis=-2)

    feed = {
        "set_name": "train",
        "set_batch_size": B,
        "set_seqlen": S,
        "rgb_camXs": rgb_camXs,
        "pix_T_cams": pix_T_cams,
        "origin_T_camXs": make_poses(k_rotX, k_tX),
        "origin_T_camRs": make_poses(k_rotR, k_tR),
        "xyz_camXs": xyz_camXs,
    }

    model = CarlaMocModelPallas(kp)
    total_loss, results, _ = model.forward(feed)
    total_loss = jax.block_until_ready(total_loss)
    _ = jax.block_until_ready(results["occ_memX0_pred"])
    assert bool(jnp.isfinite(total_loss))
    print("KERNEL_OK")
</pallas_src>

<mosaic_0001>
module attributes {stable_mosaic.version = 11 : i64} {
  func.func @_apply4x4_kernel(%arg0: memref<48x16xf32, #tpu.memory_space<vmem>>, %arg1: memref<16x128xf32, #tpu.memory_space<vmem>>, %arg2: memref<48x128xf32, #tpu.memory_space<vmem>>) attributes {dimension_semantics = [], scalar_prefetch = 0 : i64, scratch_operands = 0 : i64, tpu.core_type = #tpu.core_type<tc>} {
    %c0 = arith.constant 0 : index
    %c0_0 = arith.constant 0 : index
    %0 = vector.load %arg0[%c0, %c0_0] : memref<48x16xf32, #tpu.memory_space<vmem>>, vector<48x16xf32>
    %c0_1 = arith.constant 0 : index
    %c0_2 = arith.constant 0 : index
    %1 = vector.load %arg1[%c0_1, %c0_2] : memref<16x128xf32, #tpu.memory_space<vmem>>, vector<16x128xf32>
    %cst = arith.constant dense<0.000000e+00> : vector<48x128xf32>
    %2 = tpu.matmul %0, %1, %cst {dimension_numbers = #tpu.dot_dimension_numbers<[1], [0], [0], [1], [0, 0, 1, 1], [], []>} : vector<48x16xf32>, vector<16x128xf32>, vector<48x128xf32> -> vector<48x128xf32>
    %c0_3 = arith.constant 0 : index
    %c0_4 = arith.constant 0 : index
    %3 = vector.load %arg2[%c0_3, %c0_4] : memref<48x128xf32, #tpu.memory_space<vmem>>, vector<48x128xf32>
    tpu.vector_store %arg2[%c0_3, %c0_4], %2 {strides = array<i32>} : memref<48x128xf32, #tpu.memory_space<vmem>>, vector<48x128xf32>,
    return
  }
}

</mosaic_0001>

<llo_original>
// kernel: tpu_custom_call.1
$region0: #{tpu_custom_call.1}
  #allocation0 [shape = 'u32[]', space=smem, size = 0x4, offset = 0x4, fixed_abs, tag = 'smem constant byte address 0x4 - core index']
  #allocation1 [shape = 'u32[144,128]{1,0:T(1,128)}', space=vmem, size = 0x12000, scoped, tag = 'internal scratch']
  %s0 = inlined_call_operand.vmem [shape: f32[48,16], index: 0, kind: input, shape index: {}]
  %s1 = inlined_call_operand.vmem [shape: f32[16,128], index: 1, kind: input, shape index: {}]
  %s2 = inlined_call_operand.hbm [shape: f32[48,128], index: 2, kind: output, shape index: {}]
  %s3 = sld [smem:[#allocation0]]
  $region18: #{tpu_custom_call.1} parent=0
    _
  %s5 = ssub.s32 1, %s3
  %s6 = scalar_select 0, %s5, %s3
  $region1: #{tpu_custom_call.1} parent=0
    #allocation2 [shape = 'u8[24576]{0}', space=vmem, size = 0x6000, scoped, tag = 'output window, operand 0, single buffered']
    #allocation3 [shape = 's32[1]{0}', space=sflag, size = 0x4, scoped, tag = 'scoped memory for tpu_custom_call.1']
    %7 = vsyncpa [#allocation3], 0
    // Predicated region
    $region2: #{tpu_custom_call.1} parent=1 // pred_check
      _
    $region3: #{tpu_custom_call.1} parent=1 // pred_check_branch
      %9 = sbr.rel (0) target = $region5
    $region4: #{tpu_custom_call.1} parent=1 // pred_region
      _
    $region5: #{tpu_custom_call.1} parent=1 // pred_fallthru
      _
    // Predicated region
    $region6: #{tpu_custom_call.1} parent=1 // pred_check
      _
    $region7: #{tpu_custom_call.1} parent=1 // pred_check_branch
      %11 = sbr.rel (0) target = $region9
    $region8: #{tpu_custom_call.1} parent=1 // pred_region
      _
    $region9: #{tpu_custom_call.1} parent=1 // pred_fallthru
      _
    %v12 = vld [vmem:[%s0] sm:$0xff]
    %v13 = vld [vmem:[%s0 + $0x8] sm:$0xff]
    %v14 = vld [vmem:[%s0 + $0x10] sm:$0xff]
    %v15 = vld [vmem:[%s0 + $0x18] sm:$0xff]
    %v16 = vld [vmem:[%s0 + $0x20] sm:$0xff]
    %v17 = vld [vmem:[%s0 + $0x28] sm:$0xff]
    %v18 = vld [vmem:[%s1] sm:$0xff]
    %v19 = vld [vmem:[%s1 + $0x8] sm:$0xff]
    %vm20 = vcmask 130048
    %v22 = vsel %vm20, %v12, 0
    %v25 = vsel %vm20, %v13, 0
    %v28 = vsel %vm20, %v14, 0
    %v31 = vsel %vm20, %v15, 0
    %v34 = vsel %vm20, %v16, 0
    %v37 = vsel %vm20, %v17, 0
    %39 = vmatprep.subr.mxu0 0.0
    %40 = vmatpush1.msra.mxu0 0.0
    %41 = vmatprep.subr.mxu0 0.0
    %42 = vmatpush1.msra.mxu0 0.0
    %43 = vmatprep.subr.mxu0 0.0
    %44 = vmatpush1.msra.mxu0 0.0
    %45 = vmatprep.subr.mxu0 0.0
    %46 = vmatpush1.msra.mxu0 0.0
    %47 = vmatprep.subr.mxu0 0.0
    %48 = vmatpush1.msra.mxu0 0.0
    %49 = vmatprep.subr.mxu0 0.0
    %50 = vmatpush1.msra.mxu0 0.0
    %51 = vmatprep.subr.mxu0 0.0
    %52 = vmatpush1.msra.mxu0 0.0
    %53 = vmatprep.subr.mxu0 0.0
    %54 = vmatpush1.msra.mxu0 0.0
    %55 = vmatprep.subr.mxu0 0.0
    %56 = vmatpush1.msra.mxu0 0.0
    %57 = vmatprep.subr.mxu0 0.0
    %58 = vmatpush1.msra.mxu0 0.0
    %59 = vmatprep.subr.mxu0 0.0
    %60 = vmatpush1.msra.mxu0 0.0
    %61 = vmatprep.subr.mxu0 0.0
    %62 = vmatpush1.msra.mxu0 0.0
    %63 = vmatprep.subr.mxu0 0.0
    %64 = vmatpush1.msra.mxu0 0.0
    %65 = vmatprep.subr.mxu0 0.0
    %66 = vmatpush1.msra.mxu0 0.0
    %67 = vmatprep.subr.mxu0 0.0
    %68 = vmatpush1.msra.mxu0 %v19
    %69 = vmatprep.subr.mxu0 0.0
    %70 = vmatpush1.msra.mxu0 %v18
    %71 = vmatprep.subr.mxu0 0.0
    %72 = vmatpush2.msra.mxu0 0.0
    %73 = vmatprep.subr.mxu0 0.0
    %74 = vmatpush2.msra.mxu0 0.0
    %75 = vmatprep.subr.mxu0 0.0
    %76 = vmatpush2.msra.mxu0 0.0
    %77 = vmatprep.subr.mxu0 0.0
    %78 = vmatpush2.msra.mxu0 0.0
    %79 = vmatprep.subr.mxu0 0.0
    %80 = vmatpush2.msra.mxu0 0.0
    %81 = vmatprep.subr.mxu0 0.0
    %82 = vmatpush2.msra.mxu0 0.0
    %83 = vmatprep.subr.mxu0 0.0
    %84 = vmatpush2.msra.mxu0 0.0
    %85 = vmatprep.subr.mxu0 0.0
    %86 = vmatpush2.msra.mxu0 0.0
    %87 = vmatprep.subr.mxu0 0.0
    %88 = vmatpush2.msra.mxu0 0.0
    %89 = vmatprep.subr.mxu0 0.0
    %90 = vmatpush2.msra.mxu0 0.0
    %91 = vmatprep.subr.mxu0 0.0
    %92 = vmatpush2.msra.mxu0 0.0
    %93 = vmatprep.subr.mxu0 0.0
    %94 = vmatpush2.msra.mxu0 0.0
    %95 = vmatprep.subr.mxu0 0.0
    %96 = vmatpush2.msra.mxu0 0.0
    %97 = vmatprep.subr.mxu0 0.0
    %98 = vmatpush2.msra.mxu0 0.0
    %99 = vmatprep.subr.mxu0 0.0
    %100 = vmatpush2.msra.mxu0 0.0
    %101 = vmatprep.subr.mxu0 0.0
    %102 = vmatpush2.msra.mxu0 0.0
    %103 = vmatprep.mubr.f32.mxu0 0.0
    %104 = vmatmul.mubr.f32.gmra.mxu0 %v22
    %v105 = vpop.f32.mrf.mxu0
    %v106 = vadd.f32 0.0, %v105
    %v107 = vpop.f32.mrf.mxu0
    %108 = vmatprep.mubr.f32.mxu0 0.0
    %109 = vmatmul.mubr.f32.gmra.mxu0 %v25
    %v110 = vpop.f32.mrf.mxu0
    %v111 = vadd.f32 0.0, %v110
    %v112 = vpop.f32.mrf.mxu0
    %113 = vmatprep.mubr.f32.mxu0 0.0
    %114 = vmatmul.mubr.f32.gmra.mxu0 %v28
    %v115 = vpop.f32.mrf.mxu0
    %v116 = vadd.f32 0.0, %v115
    %v117 = vpop.f32.mrf.mxu0
    %118 = vmatprep.mubr.f32.mxu0 0.0
    %119 = vmatmul.mubr.f32.gmra.mxu0 %v31
    %v120 = vpop.f32.mrf.mxu0
    %v121 = vadd.f32 0.0, %v120
    %v122 = vpop.f32.mrf.mxu0
    %123 = vmatprep.mubr.f32.mxu0 0.0
    %124 = vmatmul.mubr.f32.gmra.mxu0 %v34
    %v125 = vpop.f32.mrf.mxu0
    %v126 = vadd.f32 0.0, %v125
    %v127 = vpop.f32.mrf.mxu0
    %128 = vmatprep.mubr.f32.mxu0 0.0
    %129 = vmatmul.mubr.f32.gmra.mxu0 %v37
    %v130 = vpop.f32.mrf.mxu0
    %v131 = vadd.f32 0.0, %v130
    %v132 = vpop.f32.mrf.mxu0
    %133 = vdwg.mxu0
    %134 = vst [vmem:[#allocation2] sm:$0xff] %v106
    %135 = vst [vmem:[#allocation2 + $0x8] sm:$0xff] %v111
    %136 = vst [vmem:[#allocation2 + $0x10] sm:$0xff] %v116
    %137 = vst [vmem:[#allocation2 + $0x18] sm:$0xff] %v121
    %138 = vst [vmem:[#allocation2 + $0x20] sm:$0xff] %v126
    %139 = vst [vmem:[#allocation2 + $0x28] sm:$0xff] %v131
    // Predicated region
    $region10: #{tpu_custom_call.1} parent=1 // pred_check
      _
    $region11: #{tpu_custom_call.1} parent=1 // pred_check_branch
      %141 = sbr.rel (0) target = $region13
    $region12: #{tpu_custom_call.1} parent=1 // pred_region
      %s143 = ssub.s32 768, 768
      %144 = vsyncadd [#allocation3], %s143
      %s145 = sshll.u32 [#allocation2], 4
      %s146 = int_to_ptr.vmem [resolvable:$true] %s145
      %151 = dma.vmem_to_hbm [thread:$0]  %s146, 768, %s2, [#allocation3], 128, 128, 8
    $region13: #{tpu_custom_call.1} parent=1 // pred_fallthru
      _
    // Predicated region
    $region14: #{tpu_custom_call.1} parent=1 // pred_check
      _
    $region15: #{tpu_custom_call.1} parent=1 // pred_check_branch
      %153 = sbr.rel (0) target = $region17
    $region16: #{tpu_custom_call.1} parent=1 // pred_region
      %154 = dma.done [#allocation3], 768
    $region17: #{tpu_custom_call.1} parent=1 // pred_fallthru
      _
    %155 = vsyncpa [#allocation3], 1

</llo_original>
